<compile_context>
chip_gen: v7x
topology: tpu7x:2x2x1
jax: 0.10.0
libtpu: 0.0.40
codegen_flags: <defaults>
</compile_context>

<pallas_src>
import math
from dataclasses import dataclass
from functools import partial

import jax
import jax.numpy as jnp
from jax.experimental import pallas as pl
from jax.experimental.pallas import tpu as pltpu


@dataclass
class DeepSeekConfig:
    hidden_size: int = 128
    num_attention_heads: int = 4
    num_experts: int = 8
    num_activated_experts: int = 3
    intermediate_size: int = 256
    num_hidden_layers: int = 2
    max_position_embeddings: int = 2048
    vocab_size: int = 1000
    use_fp8: bool = False
    use_mtp: bool = False


# ---------------------------------------------------------------------------
# Kernel: fused QKV projection + per-token head-mixing attention (one token tile)
# ---------------------------------------------------------------------------
def mla_kernel(x_ref, wq_ref, bq_ref, wk_ref, bk_ref, wv_ref, bv_ref,
               o_ref, *, num_heads, head_dim):
    x = x_ref[...]                                              # [TM, H] bf16

    # QKV projections on the MXU: bf16 x bf16 -> f32 accumulation.
    q = jnp.dot(x, wq_ref[...], preferred_element_type=jnp.float32) + bq_ref[...]
    k = jnp.dot(x, wk_ref[...], preferred_element_type=jnp.float32) + bk_ref[...]
    v = jnp.dot(x, wv_ref[...], preferred_element_type=jnp.float32) + bv_ref[...]

    scale = 1.0 / math.sqrt(head_dim)

    # Per-token attention across heads ([nh, nh] scores per token), vectorized
    # over the TM tokens of the tile.  Each head pair (i, j) is a row-wise dot
    # over head_dim (VPU multiply + lane reduce); the softmax over the small
    # head axis is done with explicit max / sum of the per-pair score columns,
    # so everything stays 2-D and lowers cleanly.
    head_ctx = []
    for i in range(num_heads):
        qi = q[:, i * head_dim:(i + 1) * head_dim]              # [TM, hd]
        s = []
        for j in range(num_heads):
            kj = k[:, j * head_dim:(j + 1) * head_dim]
            s.append(jnp.sum(qi * kj, axis=-1, keepdims=True) * scale)  # [TM, 1]
        m = s[0]
        for sj in s[1:]:
            m = jnp.maximum(m, sj)
        e = [jnp.exp(sj - m) for sj in s]
        denom = e[0]
        for ej in e[1:]:
            denom = denom + ej
        inv = pl.reciprocal(denom, approx=True)                 # EUP slot
        ctx = (e[0] * inv) * v[:, 0:head_dim]
        for j in range(1, num_heads):
            ctx = ctx + (e[j] * inv) * v[:, j * head_dim:(j + 1) * head_dim]
        head_ctx.append(ctx)                                    # [TM, hd] f32

    # Single lane-dense [TM, H] store straight into the output block.
    o_ref[...] = jnp.concatenate(head_ctx, axis=-1).astype(o_ref.dtype)


# ---------------------------------------------------------------------------
# Wrapper
# ---------------------------------------------------------------------------
def mla_forward(hidden_states, params, config, attention_mask=None,
                output_attentions=False, block_tokens=None):
    """Pallas forward for MultiHeadLatentAttention.  Returns (context, None)."""
    if attention_mask is not None:
        # TODO(synk): additive attention_mask support.
        raise NotImplementedError("attention_mask is not supported")

    B, S, H = hidden_states.shape
    nh = config.num_attention_heads
    assert H % nh == 0, "hidden_size must be divisible by num_attention_heads"
    hd = H // nh
    T = B * S

    TM = block_tokens if block_tokens is not None else min(T, 128)
    assert T % TM == 0, "token count must be divisible by the token tile"
    assert TM % 8 == 0 or TM == T, "(8,128) sublane constraint on the token tile"

    x2d = hidden_states.reshape(T, H).astype(jnp.bfloat16)      # bf16 for MXU

    kernel = partial(mla_kernel, num_heads=nh, head_dim=hd)
    resident = lambda i: (0, 0)   # weights/biases: same block every grid step

    ctx2d = pl.pallas_call(
        kernel,
        out_shape=jax.ShapeDtypeStruct((T, H), jnp.float32),
        grid_spec=pltpu.PrefetchScalarGridSpec(
            num_scalar_prefetch=0,
            grid=(T // TM,),
            in_specs=[
                pl.BlockSpec((TM, H), lambda i: (i, 0)),        # x token tile
                pl.BlockSpec((H, H), resident),                 # Wq
                pl.BlockSpec((1, H), resident),                 # bq
                pl.BlockSpec((H, H), resident),                 # Wk
                pl.BlockSpec((1, H), resident),                 # bk
                pl.BlockSpec((H, H), resident),                 # Wv
                pl.BlockSpec((1, H), resident),                 # bv
            ],
            out_specs=pl.BlockSpec((TM, H), lambda i: (i, 0)),  # context tile
        ),
        compiler_params=pltpu.CompilerParams(
            dimension_semantics=("parallel",)),                 # token-parallel
    )(x2d, params["wq"], params["bq"], params["wk"], params["bk"],
      params["wv"], params["bv"])

    context = ctx2d.reshape(B, S, H)
    # TODO(synk): output_attentions would require a second [B, S, nh, nh] output.
    return context, None


# ---------------------------------------------------------------------------
# Pure-JAX reference (same math, same bf16 weights) for a sanity check
# ---------------------------------------------------------------------------
def mla_reference(hidden_states, params, config):
    B, S, H = hidden_states.shape
    nh = config.num_attention_heads
    hd = H // nh
    x2d = hidden_states.reshape(-1, H).astype(jnp.bfloat16)

    def lin(w, b):
        return jnp.dot(x2d, w, preferred_element_type=jnp.float32) + b

    q = lin(params["wq"], params["bq"]).reshape(B, S, nh, hd)
    k = lin(params["wk"], params["bk"]).reshape(B, S, nh, hd)
    v = lin(params["wv"], params["bv"]).reshape(B, S, nh, hd)
    scores = jnp.einsum("bsnd,bsmd->bsnm", q, k) / math.sqrt(hd)
    probs = jax.nn.softmax(scores, axis=-1)
    ctx = jnp.einsum("bsnm,bsmd->bsnd", probs, v)
    return ctx.reshape(B, S, H)


# ---------------------------------------------------------------------------
# Deterministic parameter init (mimics nn.Linear U(-1/sqrt(fan_in), ...))
# ---------------------------------------------------------------------------
def init_params(config, key):
    H = config.hidden_size
    bound = 1.0 / math.sqrt(H)
    ks = jax.random.split(key, 8)

    def linear(kw, kb):
        # Weight stored as [in, out] so y = x @ W + b.  Weights kept in bf16
        # for the MXU (perf feedback); biases stay f32.
        w = jax.random.uniform(kw, (H, H), jnp.float32, -bound, bound)
        b = jax.random.uniform(kb, (1, H), jnp.float32, -bound, bound)
        return w.astype(jnp.bfloat16), b

    wq, bq = linear(ks[0], ks[1])
    wk, bk = linear(ks[2], ks[3])
    wv, bv = linear(ks[4], ks[5])
    # latent_projection: present in the reference module, output never used.
    wl, bl = linear(ks[6], ks[7])
    return {"wq": wq, "bq": bq, "wk": wk, "bk": bk, "wv": wv, "bv": bv,
            "w_latent": wl, "b_latent": bl}


if __name__ == "__main__":
    cfg = DeepSeekConfig(hidden_size=128, num_attention_heads=4, use_fp8=False)
    key = jax.random.PRNGKey(0)
    pkey, xkey = jax.random.split(key)
    params = init_params(cfg, pkey)

    B, S = 2, 8
    x = jax.random.normal(xkey, (B, S, cfg.hidden_size), dtype=jnp.float32)

    context, probs = mla_forward(x, params, cfg, block_tokens=8)
    context = jax.block_until_ready(context)

    assert context.shape == (B, S, cfg.hidden_size)
    assert probs is None
    assert bool(jnp.all(jnp.isfinite(context)))

    ref = mla_reference(x, params, cfg)
    assert bool(jnp.allclose(context, ref, rtol=5e-2, atol=5e-2)), (
        "max abs err %.3e" % float(jnp.max(jnp.abs(context - ref))))

    print("KERNEL_OK")
</pallas_src>

<mosaic_0001>
module attributes {stable_mosaic.version = 11 : i64} {
  func.func @mla_kernel(%arg0: i32, %arg1: memref<8x128xbf16, #tpu.memory_space<vmem>>, %arg2: memref<128x128xbf16, #tpu.memory_space<vmem>>, %arg3: memref<1x128xf32, #tpu.memory_space<vmem>>, %arg4: memref<128x128xbf16, #tpu.memory_space<vmem>>, %arg5: memref<1x128xf32, #tpu.memory_space<vmem>>, %arg6: memref<128x128xbf16, #tpu.memory_space<vmem>>, %arg7: memref<1x128xf32, #tpu.memory_space<vmem>>, %arg8: memref<8x128xf32, #tpu.memory_space<vmem>>) attributes {dimension_semantics = [#tpu.dimension_semantics<parallel>], iteration_bounds = array<i64: 2>, scalar_prefetch = 0 : i64, scratch_operands = 0 : i64, tpu.core_type = #tpu.core_type<tc>, window_params = [{transform_indices = @transform_0, window_bounds = array<i64: 8, 128>}, {pipeline_mode = #tpu.pipeline_mode<synchronous>, transform_indices = @transform_1, window_bounds = array<i64: 128, 128>}, {pipeline_mode = #tpu.pipeline_mode<synchronous>, transform_indices = @transform_2, window_bounds = array<i64: 1, 128>}, {pipeline_mode = #tpu.pipeline_mode<synchronous>, transform_indices = @transform_3, window_bounds = array<i64: 128, 128>}, {pipeline_mode = #tpu.pipeline_mode<synchronous>, transform_indices = @transform_4, window_bounds = array<i64: 1, 128>}, {pipeline_mode = #tpu.pipeline_mode<synchronous>, transform_indices = @transform_5, window_bounds = array<i64: 128, 128>}, {pipeline_mode = #tpu.pipeline_mode<synchronous>, transform_indices = @transform_6, window_bounds = array<i64: 1, 128>}, {transform_indices = @transform_7, window_bounds = array<i64: 8, 128>}]} {
    %c0 = arith.constant 0 : index
    %c0_0 = arith.constant 0 : index
    %0 = vector.load %arg1[%c0, %c0_0] : memref<8x128xbf16, #tpu.memory_space<vmem>>, vector<8x128xbf16>
    %c0_1 = arith.constant 0 : index
    %c0_2 = arith.constant 0 : index
    %1 = vector.load %arg2[%c0_1, %c0_2] : memref<128x128xbf16, #tpu.memory_space<vmem>>, vector<128x128xbf16>
    %cst = arith.constant dense<0.000000e+00> : vector<8x128xf32>
    %2 = tpu.matmul %0, %1, %cst {dimension_numbers = #tpu.dot_dimension_numbers<[1], [0], [0], [1], [0, 0, 1, 1], [], []>} : vector<8x128xbf16>, vector<128x128xbf16>, vector<8x128xf32> -> vector<8x128xf32>
    %c0_3 = arith.constant 0 : index
    %c0_4 = arith.constant 0 : index
    %3 = vector.load %arg3[%c0_3, %c0_4] : memref<1x128xf32, #tpu.memory_space<vmem>>, vector<1x128xf32>
    %4 = vector.broadcast %3 : vector<1x128xf32> to vector<8x128xf32>
    %5 = arith.addf %2, %4 : vector<8x128xf32>
    %c0_5 = arith.constant 0 : index
    %c0_6 = arith.constant 0 : index
    %6 = vector.load %arg4[%c0_5, %c0_6] : memref<128x128xbf16, #tpu.memory_space<vmem>>, vector<128x128xbf16>
    %cst_7 = arith.constant dense<0.000000e+00> : vector<8x128xf32>
    %7 = tpu.matmul %0, %6, %cst_7 {dimension_numbers = #tpu.dot_dimension_numbers<[1], [0], [0], [1], [0, 0, 1, 1], [], []>} : vector<8x128xbf16>, vector<128x128xbf16>, vector<8x128xf32> -> vector<8x128xf32>
    %c0_8 = arith.constant 0 : index
    %c0_9 = arith.constant 0 : index
    %8 = vector.load %arg5[%c0_8, %c0_9] : memref<1x128xf32, #tpu.memory_space<vmem>>, vector<1x128xf32>
    %9 = vector.broadcast %8 : vector<1x128xf32> to vector<8x128xf32>
    %10 = arith.addf %7, %9 : vector<8x128xf32>
    %c0_10 = arith.constant 0 : index
    %c0_11 = arith.constant 0 : index
    %11 = vector.load %arg6[%c0_10, %c0_11] : memref<128x128xbf16, #tpu.memory_space<vmem>>, vector<128x128xbf16>
    %cst_12 = arith.constant dense<0.000000e+00> : vector<8x128xf32>
    %12 = tpu.matmul %0, %11, %cst_12 {dimension_numbers = #tpu.dot_dimension_numbers<[1], [0], [0], [1], [0, 0, 1, 1], [], []>} : vector<8x128xbf16>, vector<128x128xbf16>, vector<8x128xf32> -> vector<8x128xf32>
    %c0_13 = arith.constant 0 : index
    %c0_14 = arith.constant 0 : index
    %13 = vector.load %arg7[%c0_13, %c0_14] : memref<1x128xf32, #tpu.memory_space<vmem>>, vector<1x128xf32>
    %14 = vector.broadcast %13 : vector<1x128xf32> to vector<8x128xf32>
    %15 = arith.addf %12, %14 : vector<8x128xf32>
    %16 = vector.extract_strided_slice %5 {offsets = [0, 0], sizes = [8, 32], strides = [1, 1]} : vector<8x128xf32> to vector<8x32xf32>
    %17 = vector.extract_strided_slice %10 {offsets = [0, 0], sizes = [8, 32], strides = [1, 1]} : vector<8x128xf32> to vector<8x32xf32>
    %18 = arith.mulf %16, %17 : vector<8x32xf32>
    %cst_15 = arith.constant dense<0.000000e+00> : vector<8xf32>
    %19 = vector.multi_reduction <add>, %18, %cst_15 [1] : vector<8x32xf32> to vector<8xf32>
    %20 = vector.shape_cast %19 : vector<8xf32> to vector<8x1xf32>
    %cst_16 = arith.constant 0.176776692 : f32
    %21 = vector.broadcast %cst_16 : f32 to vector<8x1xf32>
    %22 = arith.mulf %20, %21 : vector<8x1xf32>
    %23 = vector.extract_strided_slice %10 {offsets = [0, 32], sizes = [8, 32], strides = [1, 1]} : vector<8x128xf32> to vector<8x32xf32>
    %24 = arith.mulf %16, %23 : vector<8x32xf32>
    %cst_17 = arith.constant dense<0.000000e+00> : vector<8xf32>
    %25 = vector.multi_reduction <add>, %24, %cst_17 [1] : vector<8x32xf32> to vector<8xf32>
    %26 = vector.shape_cast %25 : vector<8xf32> to vector<8x1xf32>
    %cst_18 = arith.constant 0.176776692 : f32
    %27 = vector.broadcast %cst_18 : f32 to vector<8x1xf32>
    %28 = arith.mulf %26, %27 : vector<8x1xf32>
    %29 = vector.extract_strided_slice %10 {offsets = [0, 64], sizes = [8, 32], strides = [1, 1]} : vector<8x128xf32> to vector<8x32xf32>
    %30 = arith.mulf %16, %29 : vector<8x32xf32>
    %cst_19 = arith.constant dense<0.000000e+00> : vector<8xf32>
    %31 = vector.multi_reduction <add>, %30, %cst_19 [1] : vector<8x32xf32> to vector<8xf32>
    %32 = vector.shape_cast %31 : vector<8xf32> to vector<8x1xf32>
    %cst_20 = arith.constant 0.176776692 : f32
    %33 = vector.broadcast %cst_20 : f32 to vector<8x1xf32>
    %34 = arith.mulf %32, %33 : vector<8x1xf32>
    %35 = vector.extract_strided_slice %10 {offsets = [0, 96], sizes = [8, 32], strides = [1, 1]} : vector<8x128xf32> to vector<8x32xf32>
    %36 = arith.mulf %16, %35 : vector<8x32xf32>
    %cst_21 = arith.constant dense<0.000000e+00> : vector<8xf32>
    %37 = vector.multi_reduction <add>, %36, %cst_21 [1] : vector<8x32xf32> to vector<8xf32>
    %38 = vector.shape_cast %37 : vector<8xf32> to vector<8x1xf32>
    %cst_22 = arith.constant 0.176776692 : f32
    %39 = vector.broadcast %cst_22 : f32 to vector<8x1xf32>
    %40 = arith.mulf %38, %39 : vector<8x1xf32>
    %41 = arith.maximumf %22, %28 : vector<8x1xf32>
    %42 = arith.maximumf %41, %34 : vector<8x1xf32>
    %43 = arith.maximumf %42, %40 : vector<8x1xf32>
    %44 = arith.subf %22, %43 : vector<8x1xf32>
    %45 = math.exp %44 : vector<8x1xf32>
    %46 = arith.subf %28, %43 : vector<8x1xf32>
    %47 = math.exp %46 : vector<8x1xf32>
    %48 = arith.subf %34, %43 : vector<8x1xf32>
    %49 = math.exp %48 : vector<8x1xf32>
    %50 = arith.subf %40, %43 : vector<8x1xf32>
    %51 = math.exp %50 : vector<8x1xf32>
    %52 = arith.addf %45, %47 : vector<8x1xf32>
    %53 = arith.addf %52, %49 : vector<8x1xf32>
    %54 = arith.addf %53, %51 : vector<8x1xf32>
    %55 = tpu.reciprocal %54 {approx = true} : vector<8x1xf32> -> vector<8x1xf32>
    %56 = arith.mulf %45, %55 : vector<8x1xf32>
    %57 = vector.extract_strided_slice %15 {offsets = [0, 0], sizes = [8, 32], strides = [1, 1]} : vector<8x128xf32> to vector<8x32xf32>
    %58 = vector.broadcast %56 : vector<8x1xf32> to vector<8x32xf32>
    %59 = arith.mulf %58, %57 : vector<8x32xf32>
    %60 = arith.mulf %47, %55 : vector<8x1xf32>
    %61 = vector.extract_strided_slice %15 {offsets = [0, 32], sizes = [8, 32], strides = [1, 1]} : vector<8x128xf32> to vector<8x32xf32>
    %62 = vector.broadcast %60 : vector<8x1xf32> to vector<8x32xf32>
    %63 = arith.mulf %62, %61 : vector<8x32xf32>
    %64 = arith.addf %59, %63 : vector<8x32xf32>
    %65 = arith.mulf %49, %55 : vector<8x1xf32>
    %66 = vector.extract_strided_slice %15 {offsets = [0, 64], sizes = [8, 32], strides = [1, 1]} : vector<8x128xf32> to vector<8x32xf32>
    %67 = vector.broadcast %65 : vector<8x1xf32> to vector<8x32xf32>
    %68 = arith.mulf %67, %66 : vector<8x32xf32>
    %69 = arith.addf %64, %68 : vector<8x32xf32>
    %70 = arith.mulf %51, %55 : vector<8x1xf32>
    %71 = vector.extract_strided_slice %15 {offsets = [0, 96], sizes = [8, 32], strides = [1, 1]} : vector<8x128xf32> to vector<8x32xf32>
    %72 = vector.broadcast %70 : vector<8x1xf32> to vector<8x32xf32>
    %73 = arith.mulf %72, %71 : vector<8x32xf32>
    %74 = arith.addf %69, %73 : vector<8x32xf32>
    %75 = vector.extract_strided_slice %5 {offsets = [0, 32], sizes = [8, 32], strides = [1, 1]} : vector<8x128xf32> to vector<8x32xf32>
    %76 = vector.extract_strided_slice %10 {offsets = [0, 0], sizes = [8, 32], strides = [1, 1]} : vector<8x128xf32> to vector<8x32xf32>
    %77 = arith.mulf %75, %76 : vector<8x32xf32>
    %cst_23 = arith.constant dense<0.000000e+00> : vector<8xf32>
    %78 = vector.multi_reduction <add>, %77, %cst_23 [1] : vector<8x32xf32> to vector<8xf32>
    %79 = vector.shape_cast %78 : vector<8xf32> to vector<8x1xf32>
    %cst_24 = arith.constant 0.176776692 : f32
    %80 = vector.broadcast %cst_24 : f32 to vector<8x1xf32>
    %81 = arith.mulf %79, %80 : vector<8x1xf32>
    %82 = vector.extract_strided_slice %10 {offsets = [0, 32], sizes = [8, 32], strides = [1, 1]} : vector<8x128xf32> to vector<8x32xf32>
    %83 = arith.mulf %75, %82 : vector<8x32xf32>
    %cst_25 = arith.constant dense<0.000000e+00> : vector<8xf32>
    %84 = vector.multi_reduction <add>, %83, %cst_25 [1] : vector<8x32xf32> to vector<8xf32>
    %85 = vector.shape_cast %84 : vector<8xf32> to vector<8x1xf32>
    %cst_26 = arith.constant 0.176776692 : f32
    %86 = vector.broadcast %cst_26 : f32 to vector<8x1xf32>
    %87 = arith.mulf %85, %86 : vector<8x1xf32>
    %88 = vector.extract_strided_slice %10 {offsets = [0, 64], sizes = [8, 32], strides = [1, 1]} : vector<8x128xf32> to vector<8x32xf32>
    %89 = arith.mulf %75, %88 : vector<8x32xf32>
    %cst_27 = arith.constant dense<0.000000e+00> : vector<8xf32>
    %90 = vector.multi_reduction <add>, %89, %cst_27 [1] : vector<8x32xf32> to vector<8xf32>
    %91 = vector.shape_cast %90 : vector<8xf32> to vector<8x1xf32>
    %cst_28 = arith.constant 0.176776692 : f32
    %92 = vector.broadcast %cst_28 : f32 to vector<8x1xf32>
    %93 = arith.mulf %91, %92 : vector<8x1xf32>
    %94 = vector.extract_strided_slice %10 {offsets = [0, 96], sizes = [8, 32], strides = [1, 1]} : vector<8x128xf32> to vector<8x32xf32>
    %95 = arith.mulf %75, %94 : vector<8x32xf32>
    %cst_29 = arith.constant dense<0.000000e+00> : vector<8xf32>
    %96 = vector.multi_reduction <add>, %95, %cst_29 [1] : vector<8x32xf32> to vector<8xf32>
    %97 = vector.shape_cast %96 : vector<8xf32> to vector<8x1xf32>
    %cst_30 = arith.constant 0.176776692 : f32
    %98 = vector.broadcast %cst_30 : f32 to vector<8x1xf32>
    %99 = arith.mulf %97, %98 : vector<8x1xf32>
    %100 = arith.maximumf %81, %87 : vector<8x1xf32>
    %101 = arith.maximumf %100, %93 : vector<8x1xf32>
    %102 = arith.maximumf %101, %99 : vector<8x1xf32>
    %103 = arith.subf %81, %102 : vector<8x1xf32>
    %104 = math.exp %103 : vector<8x1xf32>
    %105 = arith.subf %87, %102 : vector<8x1xf32>
    %106 = math.exp %105 : vector<8x1xf32>
    %107 = arith.subf %93, %102 : vector<8x1xf32>
    %108 = math.exp %107 : vector<8x1xf32>
    %109 = arith.subf %99, %102 : vector<8x1xf32>
    %110 = math.exp %109 : vector<8x1xf32>
    %111 = arith.addf %104, %106 : vector<8x1xf32>
    %112 = arith.addf %111, %108 : vector<8x1xf32>
    %113 = arith.addf %112, %110 : vector<8x1xf32>
    %114 = tpu.reciprocal %113 {approx = true} : vector<8x1xf32> -> vector<8x1xf32>
    %115 = arith.mulf %104, %114 : vector<8x1xf32>
    %116 = vector.extract_strided_slice %15 {offsets = [0, 0], sizes = [8, 32], strides = [1, 1]} : vector<8x128xf32> to vector<8x32xf32>
    %117 = vector.broadcast %115 : vector<8x1xf32> to vector<8x32xf32>
    %118 = arith.mulf %117, %116 : vector<8x32xf32>
    %119 = arith.mulf %106, %114 : vector<8x1xf32>
    %120 = vector.extract_strided_slice %15 {offsets = [0, 32], sizes = [8, 32], strides = [1, 1]} : vector<8x128xf32> to vector<8x32xf32>
    %121 = vector.broadcast %119 : vector<8x1xf32> to vector<8x32xf32>
    %122 = arith.mulf %121, %120 : vector<8x32xf32>
    %123 = arith.addf %118, %122 : vector<8x32xf32>
    %124 = arith.mulf %108, %114 : vector<8x1xf32>
    %125 = vector.extract_strided_slice %15 {offsets = [0, 64], sizes = [8, 32], strides = [1, 1]} : vector<8x128xf32> to vector<8x32xf32>
    %126 = vector.broadcast %124 : vector<8x1xf32> to vector<8x32xf32>
    %127 = arith.mulf %126, %125 : vector<8x32xf32>
    %128 = arith.addf %123, %127 : vector<8x32xf32>
    %129 = arith.mulf %110, %114 : vector<8x1xf32>
    %130 = vector.extract_strided_slice %15 {offsets = [0, 96], sizes = [8, 32], strides = [1, 1]} : vector<8x128xf32> to vector<8x32xf32>
    %131 = vector.broadcast %129 : vector<8x1xf32> to vector<8x32xf32>
    %132 = arith.mulf %131, %130 : vector<8x32xf32>
    %133 = arith.addf %128, %132 : vector<8x32xf32>
    %134 = vector.extract_strided_slice %5 {offsets = [0, 64], sizes = [8, 32], strides = [1, 1]} : vector<8x128xf32> to vector<8x32xf32>
    %135 = vector.extract_strided_slice %10 {offsets = [0, 0], sizes = [8, 32], strides = [1, 1]} : vector<8x128xf32> to vector<8x32xf32>
    %136 = arith.mulf %134, %135 : vector<8x32xf32>
    %cst_31 = arith.constant dense<0.000000e+00> : vector<8xf32>
    %137 = vector.multi_reduction <add>, %136, %cst_31 [1] : vector<8x32xf32> to vector<8xf32>
    %138 = vector.shape_cast %137 : vector<8xf32> to vector<8x1xf32>
    %cst_32 = arith.constant 0.176776692 : f32
    %139 = vector.broadcast %cst_32 : f32 to vector<8x1xf32>
    %140 = arith.mulf %138, %139 : vector<8x1xf32>
    %141 = vector.extract_strided_slice %10 {offsets = [0, 32], sizes = [8, 32], strides = [1, 1]} : vector<8x128xf32> to vector<8x32xf32>
    %142 = arith.mulf %134, %141 : vector<8x32xf32>
    %cst_33 = arith.constant dense<0.000000e+00> : vector<8xf32>
    %143 = vector.multi_reduction <add>, %142, %cst_33 [1] : vector<8x32xf32> to vector<8xf32>
    %144 = vector.shape_cast %143 : vector<8xf32> to vector<8x1xf32>
    %cst_34 = arith.constant 0.176776692 : f32
    %145 = vector.broadcast %cst_34 : f32 to vector<8x1xf32>
    %146 = arith.mulf %144, %145 : vector<8x1xf32>
    %147 = vector.extract_strided_slice %10 {offsets = [0, 64], sizes = [8, 32], strides = [1, 1]} : vector<8x128xf32> to vector<8x32xf32>
    %148 = arith.mulf %134, %147 : vector<8x32xf32>
    %cst_35 = arith.constant dense<0.000000e+00> : vector<8xf32>
    %149 = vector.multi_reduction <add>, %148, %cst_35 [1] : vector<8x32xf32> to vector<8xf32>
    %150 = vector.shape_cast %149 : vector<8xf32> to vector<8x1xf32>
    %cst_36 = arith.constant 0.176776692 : f32
    %151 = vector.broadcast %cst_36 : f32 to vector<8x1xf32>
    %152 = arith.mulf %150, %151 : vector<8x1xf32>
    %153 = vector.extract_strided_slice %10 {offsets = [0, 96], sizes = [8, 32], strides = [1, 1]} : vector<8x128xf32> to vector<8x32xf32>
    %154 = arith.mulf %134, %153 : vector<8x32xf32>
    %cst_37 = arith.constant dense<0.000000e+00> : vector<8xf32>
    %155 = vector.multi_reduction <add>, %154, %cst_37 [1] : vector<8x32xf32> to vector<8xf32>
    %156 = vector.shape_cast %155 : vector<8xf32> to vector<8x1xf32>
    %cst_38 = arith.constant 0.176776692 : f32
    %157 = vector.broadcast %cst_38 : f32 to vector<8x1xf32>
    %158 = arith.mulf %156, %157 : vector<8x1xf32>
    %159 = arith.maximumf %140, %146 : vector<8x1xf32>
    %160 = arith.maximumf %159, %152 : vector<8x1xf32>
    %161 = arith.maximumf %160, %158 : vector<8x1xf32>
    %162 = arith.subf %140, %161 : vector<8x1xf32>
    %163 = math.exp %162 : vector<8x1xf32>
    %164 = arith.subf %146, %161 : vector<8x1xf32>
    %165 = math.exp %164 : vector<8x1xf32>
    %166 = arith.subf %152, %161 : vector<8x1xf32>
    %167 = math.exp %166 : vector<8x1xf32>
    %168 = arith.subf %158, %161 : vector<8x1xf32>
    %169 = math.exp %168 : vector<8x1xf32>
    %170 = arith.addf %163, %165 : vector<8x1xf32>
    %171 = arith.addf %170, %167 : vector<8x1xf32>
    %172 = arith.addf %171, %169 : vector<8x1xf32>
    %173 = tpu.reciprocal %172 {approx = true} : vector<8x1xf32> -> vector<8x1xf32>
    %174 = arith.mulf %163, %173 : vector<8x1xf32>
    %175 = vector.extract_strided_slice %15 {offsets = [0, 0], sizes = [8, 32], strides = [1, 1]} : vector<8x128xf32> to vector<8x32xf32>
    %176 = vector.broadcast %174 : vector<8x1xf32> to vector<8x32xf32>
    %177 = arith.mulf %176, %175 : vector<8x32xf32>
    %178 = arith.mulf %165, %173 : vector<8x1xf32>
    %179 = vector.extract_strided_slice %15 {offsets = [0, 32], sizes = [8, 32], strides = [1, 1]} : vector<8x128xf32> to vector<8x32xf32>
    %180 = vector.broadcast %178 : vector<8x1xf32> to vector<8x32xf32>
    %181 = arith.mulf %180, %179 : vector<8x32xf32>
    %182 = arith.addf %177, %181 : vector<8x32xf32>
    %183 = arith.mulf %167, %173 : vector<8x1xf32>
    %184 = vector.extract_strided_slice %15 {offsets = [0, 64], sizes = [8, 32], strides = [1, 1]} : vector<8x128xf32> to vector<8x32xf32>
    %185 = vector.broadcast %183 : vector<8x1xf32> to vector<8x32xf32>
    %186 = arith.mulf %185, %184 : vector<8x32xf32>
    %187 = arith.addf %182, %186 : vector<8x32xf32>
    %188 = arith.mulf %169, %173 : vector<8x1xf32>
    %189 = vector.extract_strided_slice %15 {offsets = [0, 96], sizes = [8, 32], strides = [1, 1]} : vector<8x128xf32> to vector<8x32xf32>
    %190 = vector.broadcast %188 : vector<8x1xf32> to vector<8x32xf32>
    %191 = arith.mulf %190, %189 : vector<8x32xf32>
    %192 = arith.addf %187, %191 : vector<8x32xf32>
    %193 = vector.extract_strided_slice %5 {offsets = [0, 96], sizes = [8, 32], strides = [1, 1]} : vector<8x128xf32> to vector<8x32xf32>
    %194 = vector.extract_strided_slice %10 {offsets = [0, 0], sizes = [8, 32], strides = [1, 1]} : vector<8x128xf32> to vector<8x32xf32>
    %195 = arith.mulf %193, %194 : vector<8x32xf32>
    %cst_39 = arith.constant dense<0.000000e+00> : vector<8xf32>
    %196 = vector.multi_reduction <add>, %195, %cst_39 [1] : vector<8x32xf32> to vector<8xf32>
    %197 = vector.shape_cast %196 : vector<8xf32> to vector<8x1xf32>
    %cst_40 = arith.constant 0.176776692 : f32
    %198 = vector.broadcast %cst_40 : f32 to vector<8x1xf32>
    %199 = arith.mulf %197, %198 : vector<8x1xf32>
    %200 = vector.extract_strided_slice %10 {offsets = [0, 32], sizes = [8, 32], strides = [1, 1]} : vector<8x128xf32> to vector<8x32xf32>
    %201 = arith.mulf %193, %200 : vector<8x32xf32>
    %cst_41 = arith.constant dense<0.000000e+00> : vector<8xf32>
    %202 = vector.multi_reduction <add>, %201, %cst_41 [1] : vector<8x32xf32> to vector<8xf32>
    %203 = vector.shape_cast %202 : vector<8xf32> to vector<8x1xf32>
    %cst_42 = arith.constant 0.176776692 : f32
    %204 = vector.broadcast %cst_42 : f32 to vector<8x1xf32>
    %205 = arith.mulf %203, %204 : vector<8x1xf32>
    %206 = vector.extract_strided_slice %10 {offsets = [0, 64], sizes = [8, 32], strides = [1, 1]} : vector<8x128xf32> to vector<8x32xf32>
    %207 = arith.mulf %193, %206 : vector<8x32xf32>
    %cst_43 = arith.constant dense<0.000000e+00> : vector<8xf32>
    %208 = vector.multi_reduction <add>, %207, %cst_43 [1] : vector<8x32xf32> to vector<8xf32>
    %209 = vector.shape_cast %208 : vector<8xf32> to vector<8x1xf32>
    %cst_44 = arith.constant 0.176776692 : f32
    %210 = vector.broadcast %cst_44 : f32 to vector<8x1xf32>
    %211 = arith.mulf %209, %210 : vector<8x1xf32>
    %212 = vector.extract_strided_slice %10 {offsets = [0, 96], sizes = [8, 32], strides = [1, 1]} : vector<8x128xf32> to vector<8x32xf32>
    %213 = arith.mulf %193, %212 : vector<8x32xf32>
    %cst_45 = arith.constant dense<0.000000e+00> : vector<8xf32>
    %214 = vector.multi_reduction <add>, %213, %cst_45 [1] : vector<8x32xf32> to vector<8xf32>
    %215 = vector.shape_cast %214 : vector<8xf32> to vector<8x1xf32>
    %cst_46 = arith.constant 0.176776692 : f32
    %216 = vector.broadcast %cst_46 : f32 to vector<8x1xf32>
    %217 = arith.mulf %215, %216 : vector<8x1xf32>
    %218 = arith.maximumf %199, %205 : vector<8x1xf32>
    %219 = arith.maximumf %218, %211 : vector<8x1xf32>
    %220 = arith.maximumf %219, %217 : vector<8x1xf32>
    %221 = arith.subf %199, %220 : vector<8x1xf32>
    %222 = math.exp %221 : vector<8x1xf32>
    %223 = arith.subf %205, %220 : vector<8x1xf32>
    %224 = math.exp %223 : vector<8x1xf32>
    %225 = arith.subf %211, %220 : vector<8x1xf32>
    %226 = math.exp %225 : vector<8x1xf32>
    %227 = arith.subf %217, %220 : vector<8x1xf32>
    %228 = math.exp %227 : vector<8x1xf32>
    %229 = arith.addf %222, %224 : vector<8x1xf32>
    %230 = arith.addf %229, %226 : vector<8x1xf32>
    %231 = arith.addf %230, %228 : vector<8x1xf32>
    %232 = tpu.reciprocal %231 {approx = true} : vector<8x1xf32> -> vector<8x1xf32>
    %233 = arith.mulf %222, %232 : vector<8x1xf32>
    %234 = vector.extract_strided_slice %15 {offsets = [0, 0], sizes = [8, 32], strides = [1, 1]} : vector<8x128xf32> to vector<8x32xf32>
    %235 = vector.broadcast %233 : vector<8x1xf32> to vector<8x32xf32>
    %236 = arith.mulf %235, %234 : vector<8x32xf32>
    %237 = arith.mulf %224, %232 : vector<8x1xf32>
    %238 = vector.extract_strided_slice %15 {offsets = [0, 32], sizes = [8, 32], strides = [1, 1]} : vector<8x128xf32> to vector<8x32xf32>
    %239 = vector.broadcast %237 : vector<8x1xf32> to vector<8x32xf32>
    %240 = arith.mulf %239, %238 : vector<8x32xf32>
    %241 = arith.addf %236, %240 : vector<8x32xf32>
    %242 = arith.mulf %226, %232 : vector<8x1xf32>
    %243 = vector.extract_strided_slice %15 {offsets = [0, 64], sizes = [8, 32], strides = [1, 1]} : vector<8x128xf32> to vector<8x32xf32>
    %244 = vector.broadcast %242 : vector<8x1xf32> to vector<8x32xf32>
    %245 = arith.mulf %244, %243 : vector<8x32xf32>
    %246 = arith.addf %241, %245 : vector<8x32xf32>
    %247 = arith.mulf %228, %232 : vector<8x1xf32>
    %248 = vector.extract_strided_slice %15 {offsets = [0, 96], sizes = [8, 32], strides = [1, 1]} : vector<8x128xf32> to vector<8x32xf32>
    %249 = vector.broadcast %247 : vector<8x1xf32> to vector<8x32xf32>
    %250 = arith.mulf %249, %248 : vector<8x32xf32>
    %251 = arith.addf %246, %250 : vector<8x32xf32>
    %252 = tpu.concatenate %74, %133, %192, %251 in 1 : vector<8x32xf32>, vector<8x32xf32>, vector<8x32xf32>, vector<8x32xf32> -> vector<8x128xf32>
    %c0_47 = arith.constant 0 : index
    %c0_48 = arith.constant 0 : index
    %253 = vector.load %arg8[%c0_47, %c0_48] : memref<8x128xf32, #tpu.memory_space<vmem>>, vector<8x128xf32>
    tpu.vector_store %arg8[%c0_47, %c0_48], %252 {strides = array<i32>} : memref<8x128xf32, #tpu.memory_space<vmem>>, vector<8x128xf32>,
    return
  }
  func.func @transform_0(%arg0: i32) -> (i32, i32) {
    %c0_i32 = arith.constant 0 : i32
    %c0_i32_0 = arith.constant 0 : i32
    return %arg0, %c0_i32 : i32, i32
  }
  func.func @transform_1(%arg0: i32) -> (i32, i32) {
    %c0_i32 = arith.constant 0 : i32
    %c0_i32_0 = arith.constant 0 : i32
    %c0_i32_1 = arith.constant 0 : i32
    return %c0_i32, %c0_i32_0 : i32, i32
  }
  func.func @transform_2(%arg0: i32) -> (i32, i32) {
    %c0_i32 = arith.constant 0 : i32
    %c0_i32_0 = arith.constant 0 : i32
    %c0_i32_1 = arith.constant 0 : i32
    return %c0_i32, %c0_i32_0 : i32, i32
  }
  func.func @transform_3(%arg0: i32) -> (i32, i32) {
    %c0_i32 = arith.constant 0 : i32
    %c0_i32_0 = arith.constant 0 : i32
    %c0_i32_1 = arith.constant 0 : i32
    return %c0_i32, %c0_i32_0 : i32, i32
  }
  func.func @transform_4(%arg0: i32) -> (i32, i32) {
    %c0_i32 = arith.constant 0 : i32
    %c0_i32_0 = arith.constant 0 : i32
    %c0_i32_1 = arith.constant 0 : i32
    return %c0_i32, %c0_i32_0 : i32, i32
  }
  func.func @transform_5(%arg0: i32) -> (i32, i32) {
    %c0_i32 = arith.constant 0 : i32
    %c0_i32_0 = arith.constant 0 : i32
    %c0_i32_1 = arith.constant 0 : i32
    return %c0_i32, %c0_i32_0 : i32, i32
  }
  func.func @transform_6(%arg0: i32) -> (i32, i32) {
    %c0_i32 = arith.constant 0 : i32
    %c0_i32_0 = arith.constant 0 : i32
    %c0_i32_1 = arith.constant 0 : i32
    return %c0_i32, %c0_i32_0 : i32, i32
  }
  func.func @transform_7(%arg0: i32) -> (i32, i32) {
    %c0_i32 = arith.constant 0 : i32
    %c0_i32_0 = arith.constant 0 : i32
    return %arg0, %c0_i32 : i32, i32
  }
}

</mosaic_0001>

<llo_original>
// kernel: tpu_custom_call.1
$region0: #{tpu_custom_call.1}
  #allocation0 [shape = 'u32[]', space=smem, size = 0x4, offset = 0x4, fixed_abs, tag = 'smem constant byte address 0x4 - core index']
  #allocation1 [shape = 'u32[144,128]{1,0:T(1,128)}', space=vmem, size = 0x12000, scoped, tag = 'internal scratch']
  %s0 = inlined_call_operand.hbm [shape: bf16[16,128], index: 0, kind: input, shape index: {}]
  %s1 = inlined_call_operand.hbm [shape: bf16[128,128], index: 1, kind: input, shape index: {}]
  %s2 = inlined_call_operand.vmem [shape: f32[1,128], index: 2, kind: input, shape index: {}]
  %s3 = inlined_call_operand.hbm [shape: bf16[128,128], index: 3, kind: input, shape index: {}]
  %s4 = inlined_call_operand.vmem [shape: f32[1,128], index: 4, kind: input, shape index: {}]
  %s5 = inlined_call_operand.hbm [shape: bf16[128,128], index: 5, kind: input, shape index: {}]
  %s6 = inlined_call_operand.vmem [shape: f32[1,128], index: 6, kind: input, shape index: {}]
  %s7 = inlined_call_operand.hbm [shape: f32[16,128], index: 7, kind: output, shape index: {}]
  %s8 = sld [smem:[#allocation0]]
  $region77: #{tpu_custom_call.1} parent=0
    _
  %s10 = ssub.s32 1, %s8
  %s11 = scalar_select 0, %s10, %s8
  $region1: #{tpu_custom_call.1} parent=0
    #allocation2 [shape = 'u8[4096]{0}', space=vmem, size = 0x1000, scoped, tag = 'input window, operand 0']
    #allocation3 [shape = 's32[2]{0}', space=sflag, size = 0x8, scoped, tag = 'scoped memory for tpu_custom_call.1']
    #allocation4 [shape = 's32[2]{0}', space=sflag, size = 0x8, scoped, tag = 'scoped memory for tpu_custom_call.1']
    #allocation5 [shape = 'u8[32768]{0}', space=vmem, size = 0x8000, scoped, tag = 'input window, operand 1, single buffered']
    #allocation6 [shape = 's32[1]{0}', space=sflag, size = 0x4, scoped, tag = 'scoped memory for tpu_custom_call.1']
    #allocation7 [shape = 'u8[32768]{0}', space=vmem, size = 0x8000, scoped, tag = 'input window, operand 3, single buffered']
    #allocation8 [shape = 'u8[32768]{0}', space=vmem, size = 0x8000, scoped, tag = 'input window, operand 5, single buffered']
    #allocation9 [shape = 's32[1]{0}', space=sflag, size = 0x4, scoped, tag = 'scoped memory for tpu_custom_call.1']
    #allocation10 [shape = 'u8[8192]{0}', space=vmem, size = 0x2000, scoped, tag = 'output window, operand 0']
    %12 = vsyncpa [#allocation3], 0
    %s13 = scalar_lea.sflag [#allocation3], 1
    %14 = vsyncpa %s13, 0
    %15 = vsyncpa [#allocation6], 0
    %16 = vsyncpa [#allocation9], 0
    %17 = vsyncpa [#allocation4], 0
    %s18 = scalar_lea.sflag [#allocation4], 1
    %19 = vsyncpa %s18, 0
    loop: start=0, step=1, limit=4
    $region2: #{tpu_custom_call.1} parent=1 // loop_pre_header
      _
    $region3: #{tpu_custom_call.1} parent=1 // loop_header
      %s21 = sphi 0, %s25
      %p22 = scmp.ge.s32.totalorder %s21, 4
      %s31 = sphi 0, %s33
      %s34 = sphi 0, %s31
      %s35 = sphi 0, %s34
      %s51 = sphi 0, %s35
      %s55 = sphi 0, %s55
      %s57 = sphi 0, %s55
      %s58 = sphi 0, %s57
      %s72 = sphi 0, %s58
      %s76 = sphi 0, %s76
      %s78 = sphi 0, %s76
      %s79 = sphi 0, %s78
      %s93 = sphi 0, %s79
      %s97 = sphi 0, %s97
      %s99 = sphi 0, %s97
      %s100 = sphi 0, %s99
      %s114 = sphi 0, %s100
      %s118 = sphi 0, %s118
      %s120 = sphi 0, %s118
      %s121 = sphi 0, %s120
      %s135 = sphi 0, %s121
      %s139 = sphi 0, %s139
      %s141 = sphi 0, %s139
      %s142 = sphi 0, %s141
      %s156 = sphi 0, %s142
      %s160 = sphi 0, %s160
      %s162 = sphi 0, %s160
      %s163 = sphi 0, %s162
      %s177 = sphi 0, %s163
      %s183 = sphi 0, %s185
      %s186 = sphi 0, %s183
      %s187 = sphi 0, %s186
      %s203 = sphi 0, %s187
    $region4: #{tpu_custom_call.1} parent=1 // loop_header_branch
      %24 = sbr.rel (%p22) target = $region8
    $region5: #{tpu_custom_call.1} parent=1 // loop_body
      %s26 = ssub.s32 %s21, 1
      %s27 = ssub.s32 %s21, 2
      %s28 = sadd.s32 %s21, 1
      %s29 = ssub.s32 %s21, %s28
      %p30 = scmp.eq.s32.totalorder %s29, 0
      %s32 = sadd.s32 %s31, 1
      %s33 = scalar_select %p30, %s31, %s32
      %p36 = pneg %p30
      %p37 = scmp.eq.s32.totalorder %s21, 1
      %p38 = por %p36, %p37
      %p39 = scmp.ne.s32.totalorder %s31, %s34
      %p40 = scmp.eq.s32.totalorder %s21, 0
      %p41 = por %p39, %p40
      %p42 = scmp.ne.s32.totalorder %s31, %s34
      %p43 = scmp.eq.s32.totalorder %s26, 1
      %p44 = por %p42, %p43
      %p45 = scmp.ne.s32.totalorder %s34, %s35
      %p46 = scmp.eq.s32.totalorder %s26, 0
      %p47 = por %p45, %p46
      %p48 = scmp.ne.s32.totalorder %s34, %s35
      %p49 = scmp.eq.s32.totalorder %s27, 1
      %p50 = por %p48, %p49
      %p52 = scmp.ne.s32.totalorder %s35, %s51
      %p53 = scmp.eq.s32.totalorder %s27, 0
      %p54 = por %p52, %p53
      %s56 = sadd.s32 %s55, 1
      %p59 = scmp.eq.s32.totalorder %s21, 1
      %p60 = scmp.ne.s32.totalorder %s55, %s57
      %p61 = scmp.eq.s32.totalorder %s21, 0
      %p62 = por %p60, %p61
      %p63 = scmp.ne.s32.totalorder %s55, %s57
      %p64 = scmp.eq.s32.totalorder %s26, 1
      %p65 = por %p63, %p64
      %p66 = scmp.ne.s32.totalorder %s57, %s58
      %p67 = scmp.eq.s32.totalorder %s26, 0
      %p68 = por %p66, %p67
      %p69 = scmp.ne.s32.totalorder %s57, %s58
      %p70 = scmp.eq.s32.totalorder %s27, 1
      %p71 = por %p69, %p70
      %p73 = scmp.ne.s32.totalorder %s58, %s72
      %p74 = scmp.eq.s32.totalorder %s27, 0
      %p75 = por %p73, %p74
      %s77 = sadd.s32 %s76, 1
      %p80 = scmp.eq.s32.totalorder %s21, 1
      %p81 = scmp.ne.s32.totalorder %s76, %s78
      %p82 = scmp.eq.s32.totalorder %s21, 0
      %p83 = por %p81, %p82
      %p84 = scmp.ne.s32.totalorder %s76, %s78
      %p85 = scmp.eq.s32.totalorder %s26, 1
      %p86 = por %p84, %p85
      %p87 = scmp.ne.s32.totalorder %s78, %s79
      %p88 = scmp.eq.s32.totalorder %s26, 0
      %p89 = por %p87, %p88
      %p90 = scmp.ne.s32.totalorder %s78, %s79
      %p91 = scmp.eq.s32.totalorder %s27, 1
      %p92 = por %p90, %p91
      %p94 = scmp.ne.s32.totalorder %s79, %s93
      %p95 = scmp.eq.s32.totalorder %s27, 0
      %p96 = por %p94, %p95
      %s98 = sadd.s32 %s97, 1
      %p101 = scmp.eq.s32.totalorder %s21, 1
      %p102 = scmp.ne.s32.totalorder %s97, %s99
      %p103 = scmp.eq.s32.totalorder %s21, 0
      %p104 = por %p102, %p103
      %p105 = scmp.ne.s32.totalorder %s97, %s99
      %p106 = scmp.eq.s32.totalorder %s26, 1
      %p107 = por %p105, %p106
      %p108 = scmp.ne.s32.totalorder %s99, %s100
      %p109 = scmp.eq.s32.totalorder %s26, 0
      %p110 = por %p108, %p109
      %p111 = scmp.ne.s32.totalorder %s99, %s100
      %p112 = scmp.eq.s32.totalorder %s27, 1
      %p113 = por %p111, %p112
      %p115 = scmp.ne.s32.totalorder %s100, %s114
      %p116 = scmp.eq.s32.totalorder %s27, 0
      %p117 = por %p115, %p116
      %s119 = sadd.s32 %s118, 1
      %p122 = scmp.eq.s32.totalorder %s21, 1
      %p123 = scmp.ne.s32.totalorder %s118, %s120
      %p124 = scmp.eq.s32.totalorder %s21, 0
      %p125 = por %p123, %p124
      %p126 = scmp.ne.s32.totalorder %s118, %s120
      %p127 = scmp.eq.s32.totalorder %s26, 1
      %p128 = por %p126, %p127
      %p129 = scmp.ne.s32.totalorder %s120, %s121
      %p130 = scmp.eq.s32.totalorder %s26, 0
      %p131 = por %p129, %p130
      %p132 = scmp.ne.s32.totalorder %s120, %s121
      %p133 = scmp.eq.s32.totalorder %s27, 1
      %p134 = por %p132, %p133
      %p136 = scmp.ne.s32.totalorder %s121, %s135
      %p137 = scmp.eq.s32.totalorder %s27, 0
      %p138 = por %p136, %p137
      %s140 = sadd.s32 %s139, 1
      %p143 = scmp.eq.s32.totalorder %s21, 1
      %p144 = scmp.ne.s32.totalorder %s139, %s141
      %p145 = scmp.eq.s32.totalorder %s21, 0
      %p146 = por %p144, %p145
      %p147 = scmp.ne.s32.totalorder %s139, %s141
      %p148 = scmp.eq.s32.totalorder %s26, 1
      %p149 = por %p147, %p148
      %p150 = scmp.ne.s32.totalorder %s141, %s142
      %p151 = scmp.eq.s32.totalorder %s26, 0
      %p152 = por %p150, %p151
      %p153 = scmp.ne.s32.totalorder %s141, %s142
      %p154 = scmp.eq.s32.totalorder %s27, 1
      %p155 = por %p153, %p154
      %p157 = scmp.ne.s32.totalorder %s142, %s156
      %p158 = scmp.eq.s32.totalorder %s27, 0
      %p159 = por %p157, %p158
      %s161 = sadd.s32 %s160, 1
      %p164 = scmp.eq.s32.totalorder %s21, 1
      %p165 = scmp.ne.s32.totalorder %s160, %s162
      %p166 = scmp.eq.s32.totalorder %s21, 0
      %p167 = por %p165, %p166
      %p168 = scmp.ne.s32.totalorder %s160, %s162
      %p169 = scmp.eq.s32.totalorder %s26, 1
      %p170 = por %p168, %p169
      %p171 = scmp.ne.s32.totalorder %s162, %s163
      %p172 = scmp.eq.s32.totalorder %s26, 0
      %p173 = por %p171, %p172
      %p174 = scmp.ne.s32.totalorder %s162, %s163
      %p175 = scmp.eq.s32.totalorder %s27, 1
      %p176 = por %p174, %p175
      %p178 = scmp.ne.s32.totalorder %s163, %s177
      %p179 = scmp.eq.s32.totalorder %s27, 0
      %p180 = por %p178, %p179
      %s181 = ssub.s32 %s21, %s28
      %p182 = scmp.eq.s32.totalorder %s181, 0
      %s184 = sadd.s32 %s183, 1
      %s185 = scalar_select %p182, %s183, %s184
      %p188 = pneg %p182
      %p189 = scmp.eq.s32.totalorder %s21, 1
      %p190 = por %p188, %p189
      %p191 = scmp.ne.s32.totalorder %s183, %s186
      %p192 = scmp.eq.s32.totalorder %s21, 0
      %p193 = por %p191, %p192
      %p194 = scmp.ne.s32.totalorder %s183, %s186
      %p195 = scmp.eq.s32.totalorder %s26, 1
      %p196 = por %p194, %p195
      %p197 = scmp.ne.s32.totalorder %s186, %s187
      %p198 = scmp.eq.s32.totalorder %s26, 0
      %p199 = por %p197, %p198
      %p200 = scmp.ne.s32.totalorder %s186, %s187
      %p201 = scmp.eq.s32.totalorder %s27, 1
      %p202 = por %p200, %p201
      %p204 = scmp.ne.s32.totalorder %s187, %s203
      %p205 = scmp.eq.s32.totalorder %s27, 0
      %p206 = por %p204, %p205
      %p207 = scmp.le.s32.totalorder 1, %s21
      %p208 = scmp.lt.s32.totalorder %s21, 3
      %p209 = pnand %p207, %p208
      %p210 = pneg %p209
      // Predicated region
      $region9: #{tpu_custom_call.1} parent=5 // pred_check
        _
      $region10: #{tpu_custom_call.1} parent=5 // pred_check_branch
        %212 = sbr.rel (%p209) target = $region12
      $region11: #{tpu_custom_call.1} parent=5 // pred_region
        %s213 = ssub.s32 %s21, 1
        // Predicated region
        $region13: #{tpu_custom_call.1} parent=11 // pred_check
          %p214 = pneg %p68
        $region14: #{tpu_custom_call.1} parent=11 // pred_check_branch
          %216 = sbr.rel (%p214) target = $region16
        $region15: #{tpu_custom_call.1} parent=11 // pred_region
          %s218 = ssub.s32 1024, 1024
          %219 = vsyncadd [#allocation6], %s218
          %s220 = sshll.u32 [#allocation5], 4
          %s221 = int_to_ptr.vmem [resolvable:$true] %s220
          %226 = dma.hbm_to_vmem [thread:$0]  %s1, 1024, %s221, [#allocation6], 64, 64, 4
        $region16: #{tpu_custom_call.1} parent=11 // pred_fallthru
          _
        // Predicated region
        $region17: #{tpu_custom_call.1} parent=11 // pred_check
          %p227 = pneg %p89
        $region18: #{tpu_custom_call.1} parent=11 // pred_check_branch
          %229 = sbr.rel (%p227) target = $region20
        $region19: #{tpu_custom_call.1} parent=11 // pred_region
          _
        $region20: #{tpu_custom_call.1} parent=11 // pred_fallthru
          _
        // Predicated region
        $region21: #{tpu_custom_call.1} parent=11 // pred_check
          %p230 = pneg %p110
        $region22: #{tpu_custom_call.1} parent=11 // pred_check_branch
          %232 = sbr.rel (%p230) target = $region24
        $region23: #{tpu_custom_call.1} parent=11 // pred_region
          %s234 = ssub.s32 1024, 1024
          %235 = vsyncadd [#allocation6], %s234
          %s236 = sshll.u32 [#allocation7], 4
          %s237 = int_to_ptr.vmem [resolvable:$true] %s236
          %242 = dma.hbm_to_vmem [thread:$0]  %s3, 1024, %s237, [#allocation6], 64, 64, 4
        $region24: #{tpu_custom_call.1} parent=11 // pred_fallthru
          _
        // Predicated region
        $region25: #{tpu_custom_call.1} parent=11 // pred_check
          %p243 = pneg %p131
        $region26: #{tpu_custom_call.1} parent=11 // pred_check_branch
          %245 = sbr.rel (%p243) target = $region28
        $region27: #{tpu_custom_call.1} parent=11 // pred_region
          _
        $region28: #{tpu_custom_call.1} parent=11 // pred_fallthru
          _
        // Predicated region
        $region29: #{tpu_custom_call.1} parent=11 // pred_check
          %p246 = pneg %p152
        $region30: #{tpu_custom_call.1} parent=11 // pred_check_branch
          %248 = sbr.rel (%p246) target = $region32
        $region31: #{tpu_custom_call.1} parent=11 // pred_region
          %s250 = ssub.s32 1024, 1024
          %251 = vsyncadd [#allocation9], %s250
          %s252 = sshll.u32 [#allocation8], 4
          %s253 = int_to_ptr.vmem [resolvable:$true] %s252
          %258 = dma.hbm_to_vmem [thread:$0]  %s5, 1024, %s253, [#allocation9], 64, 64, 4
        $region32: #{tpu_custom_call.1} parent=11 // pred_fallthru
          _
        // Predicated region
        $region33: #{tpu_custom_call.1} parent=11 // pred_check
          %p259 = pneg %p173
        $region34: #{tpu_custom_call.1} parent=11 // pred_check_branch
          %261 = sbr.rel (%p259) target = $region36
        $region35: #{tpu_custom_call.1} parent=11 // pred_region
          _
        $region36: #{tpu_custom_call.1} parent=11 // pred_fallthru
          _
      $region12: #{tpu_custom_call.1} parent=5 // pred_fallthru
        _
      %p262 = scmp.lt.s32.totalorder %s21, 2
      // Predicated region
      $region37: #{tpu_custom_call.1} parent=5 // pred_check
        %p263 = pneg %p262
      $region38: #{tpu_custom_call.1} parent=5 // pred_check_branch
        %265 = sbr.rel (%p263) target = $region40
      $region39: #{tpu_custom_call.1} parent=5 // pred_region
        // Predicated region
        $region41: #{tpu_custom_call.1} parent=39 // pred_check
          %p266 = pneg %p41
        $region42: #{tpu_custom_call.1} parent=39 // pred_check_branch
          %268 = sbr.rel (%p266) target = $region44
        $region43: #{tpu_custom_call.1} parent=39 // pred_region
          %s269 = sand.u32 %s31, 1
          %s270 = scalar_lea.sflag [#allocation3], %s269
          %s271 = sand.u32 %s31, 1
          %s272 = smul.addr %s271, 4
          %s273 = scalar_lea.vmem [#allocation2], %s272
          %s275 = ssub.s32 64, 64
          %276 = vsyncadd %s270, %s275
          %s277 = smul.addr %s21, 64
          %s278 = scalar_lea.hbm %s0, %s277
          %s280 = sshll.u32 %s273, 4
          %s281 = int_to_ptr.vmem [resolvable:$true] %s280
          %283 = dma.hbm_to_vmem [thread:$0]  %s278, 64, %s281, %s270
        $region44: #{tpu_custom_call.1} parent=39 // pred_fallthru
          _
      $region40: #{tpu_custom_call.1} parent=5 // pred_fallthru
        _
      %p284 = scmp.le.s32.totalorder 1, %s21
      %p285 = scmp.lt.s32.totalorder %s21, 3
      %p286 = pnand %p284, %p285
      %p287 = pneg %p286
      // Predicated region
      $region45: #{tpu_custom_call.1} parent=5 // pred_check
        _
      $region46: #{tpu_custom_call.1} parent=5 // pred_check_branch
        %289 = sbr.rel (%p286) target = $region48
      $region47: #{tpu_custom_call.1} parent=5 // pred_region
        %s290 = ssub.s32 %s21, 1
        %s291 = sand.u32 %s34, 1
        %s292 = scalar_lea.sflag [#allocation3], %s291
        %s293 = sand.u32 %s34, 1
        %s294 = smul.addr %s293, 4
        %s295 = scalar_lea.vmem [#allocation2], %s294
        // Predicated region
        $region49: #{tpu_custom_call.1} parent=47 // pred_check
          %p296 = pneg %p47
        $region50: #{tpu_custom_call.1} parent=47 // pred_check_branch
          %298 = sbr.rel (%p296) target = $region52
        $region51: #{tpu_custom_call.1} parent=47 // pred_region
          %299 = dma.done %s292, 64
        $region52: #{tpu_custom_call.1} parent=47 // pred_fallthru
          _
        // Predicated region
        $region53: #{tpu_custom_call.1} parent=47 // pred_check
          %p300 = pneg %p68
        $region54: #{tpu_custom_call.1} parent=47 // pred_check_branch
          %302 = sbr.rel (%p300) target = $region56
        $region55: #{tpu_custom_call.1} parent=47 // pred_region
          %303 = dma.done [#allocation6], 1024
        $region56: #{tpu_custom_call.1} parent=47 // pred_fallthru
          _
        // Predicated region
        $region57: #{tpu_custom_call.1} parent=47 // pred_check
          %p304 = pneg %p110
        $region58: #{tpu_custom_call.1} parent=47 // pred_check_branch
          %306 = sbr.rel (%p304) target = $region60
        $region59: #{tpu_custom_call.1} parent=47 // pred_region
          %307 = dma.done [#allocation6], 1024
        $region60: #{tpu_custom_call.1} parent=47 // pred_fallthru
          _
        // Predicated region
        $region61: #{tpu_custom_call.1} parent=47 // pred_check
          %p308 = pneg %p152
        $region62: #{tpu_custom_call.1} parent=47 // pred_check_branch
          %310 = sbr.rel (%p308) target = $region64
        $region63: #{tpu_custom_call.1} parent=47 // pred_region
          %311 = dma.done [#allocation9], 1024
        $region64: #{tpu_custom_call.1} parent=47 // pred_fallthru
          _
        %s312 = sand.u32 %s34, 1
        %s313 = scalar_lea.sflag [#allocation3], %s312
        %s314 = sand.u32 %s34, 1
        %s315 = smul.addr %s314, 4
        %s316 = scalar_lea.vmem [#allocation2], %s315
        %p317 = pneg %p47
        %p318 = pneg %p44
        %p319 = pneg %p68
        %p320 = pneg %p65
        %p321 = pneg %p89
        %p322 = pneg %p86
        %p323 = pneg %p110
        %p324 = pneg %p107
        %p325 = pneg %p131
        %p326 = pneg %p128
        %p327 = pneg %p152
        %p328 = pneg %p149
        %p329 = pneg %p173
        %p330 = pneg %p170
        %p331 = pneg %p199
        %p332 = pneg %p196
        %s333 = sand.u32 %s186, 1
        %s334 = scalar_lea.sflag [#allocation4], %s333
        %s335 = sand.u32 %s186, 1
        %s336 = smul.addr %s335, 8
        %s337 = scalar_lea.vmem [#allocation10], %s336
        %v339 = vld [vmem:[%s295] sm:$0xf]
        %v340 = vld [vmem:[#allocation5] sm:$0xf]
        %v341 = vld [vmem:[#allocation5 + $0x4] sm:$0xf]
        %v342 = vld [vmem:[#allocation5 + $0x8] sm:$0xf]
        %v343 = vld [vmem:[#allocation5 + $0xc] sm:$0xf]
        %v344 = vld [vmem:[#allocation5 + $0x10] sm:$0xf]
        %v345 = vld [vmem:[#allocation5 + $0x14] sm:$0xf]
        %v346 = vld [vmem:[#allocation5 + $0x18] sm:$0xf]
        %v347 = vld [vmem:[#allocation5 + $0x1c] sm:$0xf]
        %v348 = vld [vmem:[#allocation5 + $0x20] sm:$0xf]
        %v349 = vld [vmem:[#allocation5 + $0x24] sm:$0xf]
        %v350 = vld [vmem:[#allocation5 + $0x28] sm:$0xf]
        %v351 = vld [vmem:[#allocation5 + $0x2c] sm:$0xf]
        %v352 = vld [vmem:[#allocation5 + $0x30] sm:$0xf]
        %v353 = vld [vmem:[#allocation5 + $0x34] sm:$0xf]
        %v354 = vld [vmem:[#allocation5 + $0x38] sm:$0xf]
        %v355 = vld [vmem:[#allocation5 + $0x3c] sm:$0xf]
        %v356 = vld [vmem:[%s2] sm:$0x1]
        %v358 = vlaneseq
        %v359 = vshrl.u32 %v358, 7
        %v360 = vsub.s32 0, %v359
        %v361 = vrot.slane %v356, %v360
        %v379 = vunpack.c.l.b16 %v340
        %v380 = vunpack.c.l.b16 %v341
        %v381 = vunpack.c.l.b16 %v342
        %v382 = vunpack.c.l.b16 %v343
        %v383 = vunpack.c.l.b16 %v344
        %v384 = vunpack.c.l.b16 %v345
        %v385 = vunpack.c.l.b16 %v346
        %v386 = vunpack.c.l.b16 %v347
        %v387 = vunpack.c.l.b16 %v348
        %v388 = vunpack.c.l.b16 %v349
        %v389 = vunpack.c.l.b16 %v350
        %v390 = vunpack.c.l.b16 %v351
        %v391 = vunpack.c.l.b16 %v352
        %v392 = vunpack.c.l.b16 %v353
        %v393 = vunpack.c.l.b16 %v354
        %v394 = vunpack.c.l.b16 %v355
        %v395 = vpack.c.b16 %v380, %v379
        %v396 = vpack.c.b16 %v382, %v381
        %v397 = vpack.c.b16 %v384, %v383
        %v398 = vpack.c.b16 %v386, %v385
        %v399 = vpack.c.b16 %v388, %v387
        %v400 = vpack.c.b16 %v390, %v389
        %v401 = vpack.c.b16 %v392, %v391
        %v402 = vpack.c.b16 %v394, %v393
        %411 = vmatprep.subr.bf16.mxu0 0
        %412 = vmatpush1.bf16.msra.mxu0 %v395
        %413 = vmatprep.subr.bf16.mxu0 0
        %414 = vmatpush1.bf16.msra.mxu0 %v396
        %415 = vmatprep.subr.bf16.mxu0 0
        %416 = vmatpush1.bf16.msra.mxu0 %v397
        %417 = vmatprep.subr.bf16.mxu0 0
        %418 = vmatpush1.bf16.msra.mxu0 %v398
        %419 = vmatprep.subr.bf16.mxu0 0
        %420 = vmatpush1.bf16.msra.mxu0 %v399
        %421 = vmatprep.subr.bf16.mxu0 0
        %422 = vmatpush1.bf16.msra.mxu0 %v400
        %423 = vmatprep.subr.bf16.mxu0 0
        %424 = vmatpush1.bf16.msra.mxu0 %v401
        %425 = vmatprep.subr.bf16.mxu0 0
        %426 = vmatpush1.bf16.msra.mxu0 %v402
        %427 = vmatprep.subr.bf16.mxu0 0
        %428 = vmatpush1.bf16.msra.mxu0 0
        %429 = vmatprep.subr.bf16.mxu0 0
        %430 = vmatpush1.bf16.msra.mxu0 0
        %431 = vmatprep.subr.bf16.mxu0 0
        %432 = vmatpush1.bf16.msra.mxu0 0
        %433 = vmatprep.subr.bf16.mxu0 0
        %434 = vmatpush1.bf16.msra.mxu0 0
        %435 = vmatprep.subr.bf16.mxu0 0
        %436 = vmatpush1.bf16.msra.mxu0 0
        %437 = vmatprep.subr.bf16.mxu0 0
        %438 = vmatpush1.bf16.msra.mxu0 0
        %439 = vmatprep.subr.bf16.mxu0 0
        %440 = vmatpush1.bf16.msra.mxu0 0
        %441 = vmatprep.subr.bf16.mxu0 0
        %442 = vmatpush1.bf16.msra.mxu0 0
        %443 = vmatprep.mubr.bf16.mxu0 0
        %444 = vmatmul.mubr.bf16.gmra.mrb[0].mxu0 %v339
        %v445 = vpop.f32.mrb[0].mxu0
        %v446 = vadd.f32 %v361, %v445
        %v447 = vpop.f32.mrb[0].mxu0
        %v448 = vpop.f32.mrb[0].mxu0
        %v449 = vpop.f32.mrb[0].mxu0
        %450 = vdwg.mxu0
        %v451 = vld [vmem:[#allocation7] sm:$0xf]
        %v452 = vld [vmem:[#allocation7 + $0x4] sm:$0xf]
        %v453 = vld [vmem:[#allocation7 + $0x8] sm:$0xf]
        %v454 = vld [vmem:[#allocation7 + $0xc] sm:$0xf]
        %v455 = vld [vmem:[#allocation7 + $0x10] sm:$0xf]
        %v456 = vld [vmem:[#allocation7 + $0x14] sm:$0xf]
        %v457 = vld [vmem:[#allocation7 + $0x18] sm:$0xf]
        %v458 = vld [vmem:[#allocation7 + $0x1c] sm:$0xf]
        %v459 = vld [vmem:[#allocation7 + $0x20] sm:$0xf]
        %v460 = vld [vmem:[#allocation7 + $0x24] sm:$0xf]
        %v461 = vld [vmem:[#allocation7 + $0x28] sm:$0xf]
        %v462 = vld [vmem:[#allocation7 + $0x2c] sm:$0xf]
        %v463 = vld [vmem:[#allocation7 + $0x30] sm:$0xf]
        %v464 = vld [vmem:[#allocation7 + $0x34] sm:$0xf]
        %v465 = vld [vmem:[#allocation7 + $0x38] sm:$0xf]
        %v466 = vld [vmem:[#allocation7 + $0x3c] sm:$0xf]
        %v467 = vld [vmem:[%s4] sm:$0x1]
        %v469 = vlaneseq
        %v470 = vshrl.u32 %v469, 7
        %v471 = vsub.s32 0, %v470
        %v472 = vrot.slane %v467, %v471
        %v490 = vunpack.c.l.b16 %v451
        %v491 = vunpack.c.l.b16 %v452
        %v492 = vunpack.c.l.b16 %v453
        %v493 = vunpack.c.l.b16 %v454
        %v494 = vunpack.c.l.b16 %v455
        %v495 = vunpack.c.l.b16 %v456
        %v496 = vunpack.c.l.b16 %v457
        %v497 = vunpack.c.l.b16 %v458
        %v498 = vunpack.c.l.b16 %v459
        %v499 = vunpack.c.l.b16 %v460
        %v500 = vunpack.c.l.b16 %v461
        %v501 = vunpack.c.l.b16 %v462
        %v502 = vunpack.c.l.b16 %v463
        %v503 = vunpack.c.l.b16 %v464
        %v504 = vunpack.c.l.b16 %v465
        %v505 = vunpack.c.l.b16 %v466
        %v506 = vpack.c.b16 %v491, %v490
        %v507 = vpack.c.b16 %v493, %v492
        %v508 = vpack.c.b16 %v495, %v494
        %v509 = vpack.c.b16 %v497, %v496
        %v510 = vpack.c.b16 %v499, %v498
        %v511 = vpack.c.b16 %v501, %v500
        %v512 = vpack.c.b16 %v503, %v502
        %v513 = vpack.c.b16 %v505, %v504
        %522 = vmatprep.subr.bf16.mxu0 0
        %523 = vmatpush1.bf16.msra.mxu0 %v506
        %524 = vmatprep.subr.bf16.mxu0 0
        %525 = vmatpush1.bf16.msra.mxu0 %v507
        %526 = vmatprep.subr.bf16.mxu0 0
        %527 = vmatpush1.bf16.msra.mxu0 %v508
        %528 = vmatprep.subr.bf16.mxu0 0
        %529 = vmatpush1.bf16.msra.mxu0 %v509
        %530 = vmatprep.subr.bf16.mxu0 0
        %531 = vmatpush1.bf16.msra.mxu0 %v510
        %532 = vmatprep.subr.bf16.mxu0 0
        %533 = vmatpush1.bf16.msra.mxu0 %v511
        %534 = vmatprep.subr.bf16.mxu0 0
        %535 = vmatpush1.bf16.msra.mxu0 %v512
        %536 = vmatprep.subr.bf16.mxu0 0
        %537 = vmatpush1.bf16.msra.mxu0 %v513
        %538 = vmatprep.subr.bf16.mxu0 0
        %539 = vmatpush1.bf16.msra.mxu0 0
        %540 = vmatprep.subr.bf16.mxu0 0
        %541 = vmatpush1.bf16.msra.mxu0 0
        %542 = vmatprep.subr.bf16.mxu0 0
        %543 = vmatpush1.bf16.msra.mxu0 0
        %544 = vmatprep.subr.bf16.mxu0 0
        %545 = vmatpush1.bf16.msra.mxu0 0
        %546 = vmatprep.subr.bf16.mxu0 0
        %547 = vmatpush1.bf16.msra.mxu0 0
        %548 = vmatprep.subr.bf16.mxu0 0
        %549 = vmatpush1.bf16.msra.mxu0 0
        %550 = vmatprep.subr.bf16.mxu0 0
        %551 = vmatpush1.bf16.msra.mxu0 0
        %552 = vmatprep.subr.bf16.mxu0 0
        %553 = vmatpush1.bf16.msra.mxu0 0
        %554 = vmatprep.mubr.bf16.mxu0 0
        %555 = vmatmul.mubr.bf16.gmra.mrb[0].mxu0 %v339
        %v556 = vpop.f32.mrb[0].mxu0
        %v557 = vadd.f32 %v472, %v556
        %v558 = vpop.f32.mrb[0].mxu0
        %v559 = vpop.f32.mrb[0].mxu0
        %v560 = vpop.f32.mrb[0].mxu0
        %561 = vdwg.mxu0
        %v562 = vld [vmem:[#allocation8] sm:$0xf]
        %v563 = vld [vmem:[#allocation8 + $0x4] sm:$0xf]
        %v564 = vld [vmem:[#allocation8 + $0x8] sm:$0xf]
        %v565 = vld [vmem:[#allocation8 + $0xc] sm:$0xf]
        %v566 = vld [vmem:[#allocation8 + $0x10] sm:$0xf]
        %v567 = vld [vmem:[#allocation8 + $0x14] sm:$0xf]
        %v568 = vld [vmem:[#allocation8 + $0x18] sm:$0xf]
        %v569 = vld [vmem:[#allocation8 + $0x1c] sm:$0xf]
        %v570 = vld [vmem:[#allocation8 + $0x20] sm:$0xf]
        %v571 = vld [vmem:[#allocation8 + $0x24] sm:$0xf]
        %v572 = vld [vmem:[#allocation8 + $0x28] sm:$0xf]
        %v573 = vld [vmem:[#allocation8 + $0x2c] sm:$0xf]
        %v574 = vld [vmem:[#allocation8 + $0x30] sm:$0xf]
        %v575 = vld [vmem:[#allocation8 + $0x34] sm:$0xf]
        %v576 = vld [vmem:[#allocation8 + $0x38] sm:$0xf]
        %v577 = vld [vmem:[#allocation8 + $0x3c] sm:$0xf]
        %v578 = vld [vmem:[%s6] sm:$0x1]
        %v580 = vlaneseq
        %v581 = vshrl.u32 %v580, 7
        %v582 = vsub.s32 0, %v581
        %v583 = vrot.slane %v578, %v582
        %v601 = vunpack.c.l.b16 %v562
        %v602 = vunpack.c.l.b16 %v563
        %v603 = vunpack.c.l.b16 %v564
        %v604 = vunpack.c.l.b16 %v565
        %v605 = vunpack.c.l.b16 %v566
        %v606 = vunpack.c.l.b16 %v567
        %v607 = vunpack.c.l.b16 %v568
        %v608 = vunpack.c.l.b16 %v569
        %v609 = vunpack.c.l.b16 %v570
        %v610 = vunpack.c.l.b16 %v571
        %v611 = vunpack.c.l.b16 %v572
        %v612 = vunpack.c.l.b16 %v573
        %v613 = vunpack.c.l.b16 %v574
        %v614 = vunpack.c.l.b16 %v575
        %v615 = vunpack.c.l.b16 %v576
        %v616 = vunpack.c.l.b16 %v577
        %v617 = vpack.c.b16 %v602, %v601
        %v618 = vpack.c.b16 %v604, %v603
        %v619 = vpack.c.b16 %v606, %v605
        %v620 = vpack.c.b16 %v608, %v607
        %v621 = vpack.c.b16 %v610, %v609
        %v622 = vpack.c.b16 %v612, %v611
        %v623 = vpack.c.b16 %v614, %v613
        %v624 = vpack.c.b16 %v616, %v615
        %633 = vmatprep.subr.bf16.mxu0 0
        %634 = vmatpush1.bf16.msra.mxu0 %v617
        %635 = vmatprep.subr.bf16.mxu0 0
        %636 = vmatpush1.bf16.msra.mxu0 %v618
        %637 = vmatprep.subr.bf16.mxu0 0
        %638 = vmatpush1.bf16.msra.mxu0 %v619
        %639 = vmatprep.subr.bf16.mxu0 0
        %640 = vmatpush1.bf16.msra.mxu0 %v620
        %641 = vmatprep.subr.bf16.mxu0 0
        %642 = vmatpush1.bf16.msra.mxu0 %v621
        %643 = vmatprep.subr.bf16.mxu0 0
        %644 = vmatpush1.bf16.msra.mxu0 %v622
        %645 = vmatprep.subr.bf16.mxu0 0
        %646 = vmatpush1.bf16.msra.mxu0 %v623
        %647 = vmatprep.subr.bf16.mxu0 0
        %648 = vmatpush1.bf16.msra.mxu0 %v624
        %649 = vmatprep.subr.bf16.mxu0 0
        %650 = vmatpush1.bf16.msra.mxu0 0
        %651 = vmatprep.subr.bf16.mxu0 0
        %652 = vmatpush1.bf16.msra.mxu0 0
        %653 = vmatprep.subr.bf16.mxu0 0
        %654 = vmatpush1.bf16.msra.mxu0 0
        %655 = vmatprep.subr.bf16.mxu0 0
        %656 = vmatpush1.bf16.msra.mxu0 0
        %657 = vmatprep.subr.bf16.mxu0 0
        %658 = vmatpush1.bf16.msra.mxu0 0
        %659 = vmatprep.subr.bf16.mxu0 0
        %660 = vmatpush1.bf16.msra.mxu0 0
        %661 = vmatprep.subr.bf16.mxu0 0
        %662 = vmatpush1.bf16.msra.mxu0 0
        %663 = vmatprep.subr.bf16.mxu0 0
        %664 = vmatpush1.bf16.msra.mxu0 0
        %665 = vmatprep.mubr.bf16.mxu0 0
        %666 = vmatmul.mubr.bf16.gmra.mrb[0].mxu0 %v339
        %v667 = vpop.f32.mrb[0].mxu0
        %v668 = vadd.f32 %v583, %v667
        %v669 = vpop.f32.mrb[0].mxu0
        %v670 = vpop.f32.mrb[0].mxu0
        %v671 = vpop.f32.mrb[0].mxu0
        %672 = vdwg.mxu0
        %v673 = vmul.f32 %v446, %v557
        %vm674 = vcmask 261120
        %v675 = vsel %vm674, %v673, 0.0
        %676 = vadd.xlane.f32.xlu0 %v675
        %v677 = vpop.xlane.xlu0 %676
        %v678 = vmul.f32 %v677, 0.17677669
        %680 = vrot.lane.b32.xlu0 %v557, 96
        %v681 = vpop.permute.xlu0 %680
        %v683 = vmul.f32 %v446, %v681
        %v684 = vsel %vm674, %v683, 0.0
        %685 = vadd.xlane.f32.xlu0 %v684
        %v686 = vpop.xlane.xlu0 %685
        %v687 = vmul.f32 %v686, 0.17677669
        %688 = vrot.lane.b32.xlu0 %v557, 64
        %v689 = vpop.permute.xlu0 %688
        %v691 = vmul.f32 %v446, %v689
        %v692 = vsel %vm674, %v691, 0.0
        %693 = vadd.xlane.f32.xlu0 %v692
        %v694 = vpop.xlane.xlu0 %693
        %v695 = vmul.f32 %v694, 0.17677669
        %696 = vrot.lane.b32.xlu0 %v557, 32
        %v697 = vpop.permute.xlu0 %696
        %v699 = vmul.f32 %v446, %v697
        %v700 = vsel %vm674, %v699, 0.0
        %701 = vadd.xlane.f32.xlu0 %v700
        %v702 = vpop.xlane.xlu0 %701
        %v703 = vmul.f32 %v702, 0.17677669
        %v704 = vmax.f32 %v678, %v687
        %v705 = vmax.f32 %v704, %v695
        %v706 = vmax.f32 %v705, %v703
        %v707 = vsub.f32 %v678, %v706
        %v708 = vmul.f32 %v707, 1.442695
        %v709 = vpow.pop %v708
        %v710 = vsub.f32 %v687, %v706
        %v711 = vmul.f32 %v710, 1.442695
        %v712 = vpow.pop %v711
        %v713 = vsub.f32 %v695, %v706
        %v714 = vmul.f32 %v713, 1.442695
        %v715 = vpow.pop %v714
        %v716 = vsub.f32 %v703, %v706
        %v717 = vmul.f32 %v716, 1.442695
        %v718 = vpow.pop %v717
        %v719 = vadd.f32 %v709, %v712
        %v720 = vadd.f32 %v719, %v715
        %v721 = vadd.f32 %v720, %v718
        %v722 = vrcp.pop %v721
        %v723 = vmul.f32 %v709, %v722
        %v724 = vmul.f32 %v723, %v668
        %v725 = vmul.f32 %v712, %v722
        %v726 = vmul.f32 %v725, %v668
        %728 = vrot.lane.b32.xlu0 %v726, 96
        %v729 = vpop.permute.xlu0 %728
        %v731 = vadd.f32 %v724, %v729
        %v732 = vmul.f32 %v715, %v722
        %v733 = vmul.f32 %v732, %v668
        %735 = vrot.lane.b32.xlu0 %v733, 64
        %v736 = vpop.permute.xlu0 %735
        %v738 = vadd.f32 %v731, %v736
        %v739 = vmul.f32 %v718, %v722
        %v740 = vmul.f32 %v739, %v668
        %742 = vrot.lane.b32.xlu0 %v740, 32
        %v743 = vpop.permute.xlu0 %742
        %v745 = vadd.f32 %v738, %v743
        %747 = vrot.lane.b32.xlu0 %v699, 96
        %v748 = vpop.permute.xlu0 %747
        %v750 = vsel %vm674, %v748, 0.0
        %751 = vadd.xlane.f32.xlu0 %v750
        %v752 = vpop.xlane.xlu0 %751
        %v753 = vmul.f32 %v752, 0.17677669
        %755 = vrot.lane.b32.xlu0 %v673, 96
        %v756 = vpop.permute.xlu0 %755
        %v758 = vsel %vm674, %v756, 0.0
        %759 = vadd.xlane.f32.xlu0 %v758
        %v760 = vpop.xlane.xlu0 %759
        %v761 = vmul.f32 %v760, 0.17677669
        %763 = vrot.lane.b32.xlu0 %v683, 96
        %v764 = vpop.permute.xlu0 %763
        %v766 = vsel %vm674, %v764, 0.0
        %767 = vadd.xlane.f32.xlu0 %v766
        %v768 = vpop.xlane.xlu0 %767
        %v769 = vmul.f32 %v768, 0.17677669
        %771 = vrot.lane.b32.xlu0 %v691, 96
        %v772 = vpop.permute.xlu0 %771
        %v774 = vsel %vm674, %v772, 0.0
        %775 = vadd.xlane.f32.xlu0 %v774
        %v776 = vpop.xlane.xlu0 %775
        %v777 = vmul.f32 %v776, 0.17677669
        %v778 = vmax.f32 %v753, %v761
        %v779 = vmax.f32 %v778, %v769
        %v780 = vmax.f32 %v779, %v777
        %v781 = vsub.f32 %v753, %v780
        %v782 = vmul.f32 %v781, 1.442695
        %v783 = vpow.pop %v782
        %v784 = vsub.f32 %v761, %v780
        %v785 = vmul.f32 %v784, 1.442695
        %v786 = vpow.pop %v785
        %v787 = vsub.f32 %v769, %v780
        %v788 = vmul.f32 %v787, 1.442695
        %v789 = vpow.pop %v788
        %v790 = vsub.f32 %v777, %v780
        %v791 = vmul.f32 %v790, 1.442695
        %v792 = vpow.pop %v791
        %v793 = vadd.f32 %v783, %v786
        %v794 = vadd.f32 %v793, %v789
        %v795 = vadd.f32 %v794, %v792
        %v796 = vrcp.pop %v795
        %v797 = vmul.f32 %v783, %v796
        %v798 = vmul.f32 %v797, %v668
        %v799 = vmul.f32 %v786, %v796
        %v800 = vmul.f32 %v799, %v668
        %802 = vrot.lane.b32.xlu0 %v800, 96
        %v803 = vpop.permute.xlu0 %802
        %v805 = vadd.f32 %v798, %v803
        %v806 = vmul.f32 %v789, %v796
        %v807 = vmul.f32 %v806, %v668
        %809 = vrot.lane.b32.xlu0 %v807, 64
        %v810 = vpop.permute.xlu0 %809
        %v812 = vadd.f32 %v805, %v810
        %v813 = vmul.f32 %v792, %v796
        %v814 = vmul.f32 %v813, %v668
        %816 = vrot.lane.b32.xlu0 %v814, 32
        %v817 = vpop.permute.xlu0 %816
        %v819 = vadd.f32 %v812, %v817
        %820 = vrot.lane.b32.xlu0 %v691, 64
        %v821 = vpop.permute.xlu0 %820
        %v823 = vsel %vm674, %v821, 0.0
        %824 = vadd.xlane.f32.xlu0 %v823
        %v825 = vpop.xlane.xlu0 %824
        %v826 = vmul.f32 %v825, 0.17677669
        %827 = vrot.lane.b32.xlu0 %v699, 64
        %v828 = vpop.permute.xlu0 %827
        %v830 = vsel %vm674, %v828, 0.0
        %831 = vadd.xlane.f32.xlu0 %v830
        %v832 = vpop.xlane.xlu0 %831
        %v833 = vmul.f32 %v832, 0.17677669
        %834 = vrot.lane.b32.xlu0 %v673, 64
        %v835 = vpop.permute.xlu0 %834
        %v837 = vsel %vm674, %v835, 0.0
        %838 = vadd.xlane.f32.xlu0 %v837
        %v839 = vpop.xlane.xlu0 %838
        %v840 = vmul.f32 %v839, 0.17677669
        %841 = vrot.lane.b32.xlu0 %v683, 64
        %v842 = vpop.permute.xlu0 %841
        %v844 = vsel %vm674, %v842, 0.0
        %845 = vadd.xlane.f32.xlu0 %v844
        %v846 = vpop.xlane.xlu0 %845
        %v847 = vmul.f32 %v846, 0.17677669
        %v848 = vmax.f32 %v826, %v833
        %v849 = vmax.f32 %v848, %v840
        %v850 = vmax.f32 %v849, %v847
        %v851 = vsub.f32 %v826, %v850
        %v852 = vmul.f32 %v851, 1.442695
        %v853 = vpow.pop %v852
        %v854 = vsub.f32 %v833, %v850
        %v855 = vmul.f32 %v854, 1.442695
        %v856 = vpow.pop %v855
        %v857 = vsub.f32 %v840, %v850
        %v858 = vmul.f32 %v857, 1.442695
        %v859 = vpow.pop %v858
        %v860 = vsub.f32 %v847, %v850
        %v861 = vmul.f32 %v860, 1.442695
        %v862 = vpow.pop %v861
        %v863 = vadd.f32 %v853, %v856
        %v864 = vadd.f32 %v863, %v859
        %v865 = vadd.f32 %v864, %v862
        %v866 = vrcp.pop %v865
        %v867 = vmul.f32 %v853, %v866
        %v868 = vmul.f32 %v867, %v668
        %v869 = vmul.f32 %v856, %v866
        %v870 = vmul.f32 %v869, %v668
        %872 = vrot.lane.b32.xlu0 %v870, 96
        %v873 = vpop.permute.xlu0 %872
        %v875 = vadd.f32 %v868, %v873
        %v876 = vmul.f32 %v859, %v866
        %v877 = vmul.f32 %v876, %v668
        %879 = vrot.lane.b32.xlu0 %v877, 64
        %v880 = vpop.permute.xlu0 %879
        %v882 = vadd.f32 %v875, %v880
        %v883 = vmul.f32 %v862, %v866
        %v884 = vmul.f32 %v883, %v668
        %886 = vrot.lane.b32.xlu0 %v884, 32
        %v887 = vpop.permute.xlu0 %886
        %v889 = vadd.f32 %v882, %v887
        %890 = vrot.lane.b32.xlu0 %v683, 32
        %v891 = vpop.permute.xlu0 %890
        %v893 = vsel %vm674, %v891, 0.0
        %894 = vadd.xlane.f32.xlu0 %v893
        %v895 = vpop.xlane.xlu0 %894
        %v896 = vmul.f32 %v895, 0.17677669
        %897 = vrot.lane.b32.xlu0 %v691, 32
        %v898 = vpop.permute.xlu0 %897
        %v900 = vsel %vm674, %v898, 0.0
        %901 = vadd.xlane.f32.xlu0 %v900
        %v902 = vpop.xlane.xlu0 %901
        %v903 = vmul.f32 %v902, 0.17677669
        %904 = vrot.lane.b32.xlu0 %v699, 32
        %v905 = vpop.permute.xlu0 %904
        %v907 = vsel %vm674, %v905, 0.0
        %908 = vadd.xlane.f32.xlu0 %v907
        %v909 = vpop.xlane.xlu0 %908
        %v910 = vmul.f32 %v909, 0.17677669
        %911 = vrot.lane.b32.xlu0 %v673, 32
        %v912 = vpop.permute.xlu0 %911
        %v914 = vsel %vm674, %v912, 0.0
        %915 = vadd.xlane.f32.xlu0 %v914
        %v916 = vpop.xlane.xlu0 %915
        %v917 = vmul.f32 %v916, 0.17677669
        %v918 = vmax.f32 %v896, %v903
        %v919 = vmax.f32 %v918, %v910
        %v920 = vmax.f32 %v919, %v917
        %v921 = vsub.f32 %v896, %v920
        %v922 = vmul.f32 %v921, 1.442695
        %v923 = vpow.pop %v922
        %v924 = vsub.f32 %v903, %v920
        %v925 = vmul.f32 %v924, 1.442695
        %v926 = vpow.pop %v925
        %v927 = vsub.f32 %v910, %v920
        %v928 = vmul.f32 %v927, 1.442695
        %v929 = vpow.pop %v928
        %v930 = vsub.f32 %v917, %v920
        %v931 = vmul.f32 %v930, 1.442695
        %v932 = vpow.pop %v931
        %v933 = vadd.f32 %v923, %v926
        %v934 = vadd.f32 %v933, %v929
        %v935 = vadd.f32 %v934, %v932
        %v936 = vrcp.pop %v935
        %v937 = vmul.f32 %v923, %v936
        %v938 = vmul.f32 %v937, %v668
        %v939 = vmul.f32 %v926, %v936
        %v940 = vmul.f32 %v939, %v668
        %942 = vrot.lane.b32.xlu0 %v940, 96
        %v943 = vpop.permute.xlu0 %942
        %v945 = vadd.f32 %v938, %v943
        %v946 = vmul.f32 %v929, %v936
        %v947 = vmul.f32 %v946, %v668
        %949 = vrot.lane.b32.xlu0 %v947, 64
        %v950 = vpop.permute.xlu0 %949
        %v952 = vadd.f32 %v945, %v950
        %v953 = vmul.f32 %v932, %v936
        %v954 = vmul.f32 %v953, %v668
        %956 = vrot.lane.b32.xlu0 %v954, 32
        %v957 = vpop.permute.xlu0 %956
        %v959 = vadd.f32 %v952, %v957
        %961 = vrot.lane.b32.xlu0 %v819, 32
        %v962 = vpop.permute.xlu0 %961
        %965 = vrot.lane.b32.xlu0 %v889, 64
        %v966 = vpop.permute.xlu0 %965
        %969 = vrot.lane.b32.xlu0 %v959, 96
        %v970 = vpop.permute.xlu0 %969
        %v972 = vsel %vm674, %v745, %v962
        %vm973 = vcmask 523264
        %v974 = vsel %vm973, %v972, %v966
        %vm975 = vcmask 785408
        %v976 = vsel %vm975, %v974, %v970
        %977 = vst [vmem:[%s337] sm:$0xff] %v976
        %s978 = sand.u32 %s186, 1
        %s979 = scalar_lea.sflag [#allocation4], %s978
        %s980 = sand.u32 %s186, 1
        %s981 = smul.addr %s980, 8
        %s982 = scalar_lea.vmem [#allocation10], %s981
        // Predicated region
        $region65: #{tpu_custom_call.1} parent=47 // pred_check
          %p983 = pneg %p196
        $region66: #{tpu_custom_call.1} parent=47 // pred_check_branch
          %985 = sbr.rel (%p983) target = $region68
        $region67: #{tpu_custom_call.1} parent=47 // pred_region
          %s987 = ssub.s32 128, 128
          %988 = vsyncadd %s979, %s987
          %s989 = smul.addr %s26, 128
          %s990 = scalar_lea.hbm %s7, %s989
          %s992 = sshll.u32 %s982, 4
          %s993 = int_to_ptr.vmem [resolvable:$true] %s992
          %995 = dma.vmem_to_hbm [thread:$0]  %s993, 128, %s990, %s979
        $region68: #{tpu_custom_call.1} parent=47 // pred_fallthru
          _
      $region48: #{tpu_custom_call.1} parent=5 // pred_fallthru
        _
      %p996 = scmp.le.s32.totalorder 2, %s21
      // Predicated region
      $region69: #{tpu_custom_call.1} parent=5 // pred_check
        %p997 = pneg %p996
      $region70: #{tpu_custom_call.1} parent=5 // pred_check_branch
        %999 = sbr.rel (%p997) target = $region72
      $region71: #{tpu_custom_call.1} parent=5 // pred_region
        %s1000 = ssub.s32 %s21, 2
        // Predicated region
        $region73: #{tpu_custom_call.1} parent=71 // pred_check
          %p1001 = pneg %p202
        $region74: #{tpu_custom_call.1} parent=71 // pred_check_branch
          %1003 = sbr.rel (%p1001) target = $region76
        $region75: #{tpu_custom_call.1} parent=71 // pred_region
          %s1004 = sand.u32 %s187, 1
          %s1005 = scalar_lea.sflag [#allocation4], %s1004
          %s1006 = sand.u32 %s187, 1
          %s1007 = smul.addr %s1006, 8
          %s1008 = scalar_lea.vmem [#allocation10], %s1007
          %1009 = dma.done %s1005, 128
        $region76: #{tpu_custom_call.1} parent=71 // pred_fallthru
          _
      $region72: #{tpu_custom_call.1} parent=5 // pred_fallthru
        _
    $region6: #{tpu_custom_call.1} parent=1 // loop_footer
      %s25 = sadd.s32 1, %s21
    $region7: #{tpu_custom_call.1} parent=1 // loop_footer_branch
      %20 = sbr.rel target = $region3
    $region8: #{tpu_custom_call.1} parent=1 // loop_exit
      _
    %1010 = vsyncpa [#allocation3], 1
    %s1011 = scalar_lea.sflag [#allocation3], 1
    %1012 = vsyncpa %s1011, 1
    %1013 = vsyncpa [#allocation6], 1
    %1014 = vsyncpa [#allocation9], 1
    %1015 = vsyncpa [#allocation4], 1
    %s1016 = scalar_lea.sflag [#allocation4], 1
    %1017 = vsyncpa %s1016, 1

</llo_original>
